<compile_context>
chip_gen: v6e
topology: v6e:2x2x1
jax: 0.10.0
libtpu: 0.0.40
codegen_flags: <defaults>
</compile_context>

<pallas_src>
import jax
import jax.numpy as jnp
from jax.experimental import pallas as pl
from jax.experimental.pallas import tpu as pltpu


def _copy_kernel(x_ref, o_ref):
    # Pure lane-dense 2D tile copy (the flatten already happened for free in
    # the wrapper).
    o_ref[...] = x_ref[...]


def _choose_tile(dim, align, target):
    """Largest tile <= target that is a multiple of `align` and evenly divides
    `dim`; falls back to the full dimension (always legal for TPU tiling)."""
    if dim <= target:
        return dim
    t = (target // align) * align
    while t >= align:
        if dim % t == 0:
            return t
        t -= align
    return dim


def reshape_layer_fast(x):
    """The actually-optimal implementation: metadata-only reshape, 0 bytes moved."""
    return jnp.reshape(x, (x.shape[0], -1))


def reshape_layer(x):
    """Pallas implementation of _ReshapeLayer(ndim=2).forward.

    Flatten is done (for free) in the wrapper; the Pallas kernel is a tiled,
    double-buffered 2D memcpy of the flattened array.
    """
    n = x.shape[0]
    flat = 1
    for d in x.shape[1:]:
        flat *= d

    # Free, metadata-only flatten at the XLA level.
    x2d = jnp.reshape(x, (n, flat))

    # Tile selection:
    #  - sublane (rows): multiple of 8 when possible, <= 256 rows
    #  - lane (cols):    multiple of 128 when possible, <= 2048 lanes
    # => tile <= 256*2048*4B = 2 MiB (f32); with double-buffered in + out the
    #    pipeline footprint is ~8 MiB, safe on every generation's scoped VMEM.
    bn = _choose_tile(n, 8, 256)
    bf = _choose_tile(flat, 128, 2048)

    grid = (pl.cdiv(n, bn), pl.cdiv(flat, bf))
    spec = pl.BlockSpec((bn, bf), lambda i, j: (i, j))

    out_shape = jax.ShapeDtypeStruct((n, flat), x.dtype)

    return pl.pallas_call(
        _copy_kernel,
        out_shape=out_shape,
        grid=grid,
        in_specs=[spec],
        out_specs=spec,
        compiler_params=pltpu.CompilerParams(
            dimension_semantics=("parallel", "parallel"),
        ),
    )(x2d)


if __name__ == "__main__":
    key = jax.random.PRNGKey(0)
    # NCHW input, consistent with a conv feature map feeding the reshape layer.
    x = jax.random.normal(key, (2, 4, 16, 16), dtype=jnp.float32)

    y = reshape_layer(x)
    y = jax.block_until_ready(y)

    # Reference: plain JAX reshape (same semantics as torch.reshape on a
    # contiguous NCHW tensor).
    y_ref = x.reshape(x.shape[0], -1)

    assert y.shape == (2, 4 * 16 * 16), y.shape
    assert y.dtype == x.dtype
    assert bool(jnp.array_equal(y, y_ref))

    # Sanity-check the zero-copy fast path too.
    y_fast = jax.block_until_ready(reshape_layer_fast(x))
    assert bool(jnp.array_equal(y_fast, y_ref))

    print("KERNEL_OK")
</pallas_src>

<mosaic_0001>
module attributes {stable_mosaic.version = 11 : i64} {
  func.func @_copy_kernel(%arg0: i32, %arg1: i32, %arg2: memref<2x1024xf32, #tpu.memory_space<vmem>>, %arg3: memref<2x1024xf32, #tpu.memory_space<vmem>>) attributes {dimension_semantics = [#tpu.dimension_semantics<parallel>, #tpu.dimension_semantics<parallel>], iteration_bounds = array<i64: 1, 1>, scalar_prefetch = 0 : i64, scratch_operands = 0 : i64, tpu.core_type = #tpu.core_type<tc>, window_params = [{transform_indices = @transform_0, window_bounds = array<i64: 2, 1024>}, {transform_indices = @transform_1, window_bounds = array<i64: 2, 1024>}]} {
    %c0 = arith.constant 0 : index
    %c0_0 = arith.constant 0 : index
    %0 = vector.load %arg2[%c0, %c0_0] : memref<2x1024xf32, #tpu.memory_space<vmem>>, vector<2x1024xf32>
    %c0_1 = arith.constant 0 : index
    %c0_2 = arith.constant 0 : index
    %1 = vector.load %arg3[%c0_1, %c0_2] : memref<2x1024xf32, #tpu.memory_space<vmem>>, vector<2x1024xf32>
    tpu.vector_store %arg3[%c0_1, %c0_2], %0 {strides = array<i32>} : memref<2x1024xf32, #tpu.memory_space<vmem>>, vector<2x1024xf32>,
    return
  }
  func.func @transform_0(%arg0: i32, %arg1: i32) -> (i32, i32) {
    %c0_i32 = arith.constant 0 : i32
    return %arg0, %arg1 : i32, i32
  }
  func.func @transform_1(%arg0: i32, %arg1: i32) -> (i32, i32) {
    %c0_i32 = arith.constant 0 : i32
    return %arg0, %arg1 : i32, i32
  }
}

</mosaic_0001>

<llo_original>
// kernel: tpu_custom_call.1
$region0: #{tpu_custom_call.1}
  #allocation0 [shape = 'u32[]', space=smem, size = 0x4, offset = 0x4, fixed_abs, tag = 'smem constant byte address 0x4 - core index']
  #allocation1 [shape = 'u32[144,128]{1,0:T(1,128)}', space=vmem, size = 0x12000, scoped, tag = 'internal scratch']
  %s0 = inlined_call_operand.hbm [shape: f32[2,1024], index: 0, kind: input, shape index: {}]
  %s1 = inlined_call_operand.hbm [shape: f32[2,1024], index: 1, kind: output, shape index: {}]
  %s2 = sld [smem:[#allocation0]]
  $region18: #{tpu_custom_call.1} parent=0
    _
  %s4 = ssub.s32 1, %s2
  %s5 = scalar_select 0, %s4, %s2
  $region1: #{tpu_custom_call.1} parent=0
    #allocation2 [shape = 'u8[8192]{0}', space=vmem, size = 0x2000, scoped, tag = 'input window, operand 0, single buffered']
    #allocation3 [shape = 's32[1]{0}', space=sflag, size = 0x4, scoped, tag = 'scoped memory for tpu_custom_call.1']
    #allocation4 [shape = 's32[1]{0}', space=sflag, size = 0x4, scoped, tag = 'scoped memory for tpu_custom_call.1']
    #allocation5 [shape = 'u8[8192]{0}', space=vmem, size = 0x2000, scoped, tag = 'output window, operand 0, single buffered']
    %6 = vsyncpa [#allocation3], 0
    %7 = vsyncpa [#allocation4], 0
    // Predicated region
    $region2: #{tpu_custom_call.1} parent=1 // pred_check
      _
    $region3: #{tpu_custom_call.1} parent=1 // pred_check_branch
      %9 = sbr.rel (0) target = $region5
    $region4: #{tpu_custom_call.1} parent=1 // pred_region
      %s11 = ssub.s32 256, 256
      %12 = vsyncadd [#allocation3], %s11
      %s14 = sshll.u32 [#allocation2], 4
      %s15 = int_to_ptr.vmem [resolvable:$true] %s14
      %17 = dma.hbm_to_vmem [thread:$0]  %s0, 256, %s15, [#allocation3]
    $region5: #{tpu_custom_call.1} parent=1 // pred_fallthru
      _
    // Predicated region
    $region6: #{tpu_custom_call.1} parent=1 // pred_check
      _
    $region7: #{tpu_custom_call.1} parent=1 // pred_check_branch
      %19 = sbr.rel (0) target = $region9
    $region8: #{tpu_custom_call.1} parent=1 // pred_region
      %20 = dma.done [#allocation3], 256
    $region9: #{tpu_custom_call.1} parent=1 // pred_fallthru
      _
    %v21 = vld [vmem:[#allocation2] sm:$0xff]
    %v22 = vld [vmem:[#allocation2 + $0x8] sm:$0xff]
    %23 = vst [vmem:[#allocation5] sm:$0xff] %v21
    %24 = vst [vmem:[#allocation5 + $0x8] sm:$0xff] %v22
    // Predicated region
    $region10: #{tpu_custom_call.1} parent=1 // pred_check
      _
    $region11: #{tpu_custom_call.1} parent=1 // pred_check_branch
      %26 = sbr.rel (0) target = $region13
    $region12: #{tpu_custom_call.1} parent=1 // pred_region
      %s28 = ssub.s32 256, 256
      %29 = vsyncadd [#allocation4], %s28
      %s31 = sshll.u32 [#allocation5], 4
      %s32 = int_to_ptr.vmem [resolvable:$true] %s31
      %34 = dma.vmem_to_hbm [thread:$0]  %s32, 256, %s1, [#allocation4]
    $region13: #{tpu_custom_call.1} parent=1 // pred_fallthru
      _
    // Predicated region
    $region14: #{tpu_custom_call.1} parent=1 // pred_check
      _
    $region15: #{tpu_custom_call.1} parent=1 // pred_check_branch
      %36 = sbr.rel (0) target = $region17
    $region16: #{tpu_custom_call.1} parent=1 // pred_region
      %37 = dma.done [#allocation4], 256
    $region17: #{tpu_custom_call.1} parent=1 // pred_fallthru
      _
    %38 = vsyncpa [#allocation3], 1
    %39 = vsyncpa [#allocation4], 1

</llo_original>
